<compile_context>
chip_gen: v7x
topology: tpu7x:2x2x1
jax: 0.10.0
libtpu: 0.0.40
codegen_flags: <defaults>
</compile_context>

<pallas_src>
import functools

import jax
import jax.numpy as jnp
from jax.experimental import pallas as pl
from jax.experimental.pallas import tpu as pltpu

LANE = 128        # TPU lane width; feature dims are padded to this
TILE_DST = 128    # output rows per grid step in the aggregation kernel
TILE_SRC = 128    # reduction (source-row) chunk per grid step
TILE_ROW = 128    # rows per grid step in the projection kernel
VMEM_LIMIT = 32 * 1024 * 1024  # explicit scoped-VMEM budget (fits v7x's 64 MiB)


def _round_up(n, m):
    return ((n + m - 1) // m) * m


def _pad2(a, rows, cols):
    return jnp.zeros((rows, cols), a.dtype).at[:a.shape[0], :a.shape[1]].set(a)


# --------------------- projection kernel: xw = x @ W -------------------------
# bf16 inputs, f32 MXU accumulation, bf16 output (feeds the next bf16 matmul).

def _project_kernel(x_ref, w_ref, out_ref):
    out_ref[...] = jnp.dot(
        x_ref[...], w_ref[...], preferred_element_type=jnp.float32
    ).astype(out_ref.dtype)


def project(x_bf16, w_bf16):
    m, k = x_bf16.shape
    _, n = w_bf16.shape
    return pl.pallas_call(
        _project_kernel,
        out_shape=jax.ShapeDtypeStruct((m, n), jnp.bfloat16),
        grid_spec=pltpu.PrefetchScalarGridSpec(
            num_scalar_prefetch=0,
            grid=(m // TILE_ROW,),
            in_specs=[
                pl.BlockSpec((TILE_ROW, k), lambda r: (r, 0)),
                pl.BlockSpec((k, n), lambda r: (0, 0)),
            ],
            out_specs=pl.BlockSpec((TILE_ROW, n), lambda r: (r, 0)),
        ),
        compiler_params=pltpu.CompilerParams(
            dimension_semantics=("parallel",),
            vmem_limit_bytes=VMEM_LIMIT,
        ),
        cost_estimate=pl.CostEstimate(
            flops=2 * m * k * n,
            transcendentals=0,
            bytes_accessed=2 * (m * k + k * n + m * n),
        ),
    )(x_bf16, w_bf16)


# --------- aggregation kernel: out = PReLU(scale * (inc @ xw) + bias) --------
# Tiled: i over destination-row tiles (parallel), k over source-row tiles
# (arbitrary reduction) with an f32 VMEM accumulator; f32 epilogue at k==last.

def _agg_kernel(inc_ref, xw_ref, scale_ref, bias_ref, out_ref, acc_ref, *, alpha):
    k = pl.program_id(1)

    @pl.when(k == 0)
    def _():
        acc_ref[...] = jnp.zeros_like(acc_ref)

    acc_ref[...] += jnp.dot(
        inc_ref[...], xw_ref[...], preferred_element_type=jnp.float32
    )

    @pl.when(k == pl.num_programs(1) - 1)
    def _():
        y = acc_ref[...] * scale_ref[...] + bias_ref[...]
        out_ref[...] = jnp.where(y >= 0.0, y, alpha * y)


def aggregate(inc_bf16, xw_bf16, scale_f32, bias_f32, alpha):
    """inc: [M_dst, M_src] bf16, xw: [M_src, D] bf16, scale: [M_dst, 1] f32,
       bias: [1, D] f32  ->  [M_dst, D] f32."""
    m_dst, m_src = inc_bf16.shape
    d_out = xw_bf16.shape[1]
    kernel = functools.partial(_agg_kernel, alpha=float(alpha))
    flops = 2 * m_dst * m_src * d_out
    bytes_accessed = (2 * m_dst * m_src + 2 * m_src * d_out
                      + 4 * m_dst * d_out + 4 * m_dst + 4 * d_out)
    return pl.pallas_call(
        kernel,
        out_shape=jax.ShapeDtypeStruct((m_dst, d_out), jnp.float32),
        grid_spec=pltpu.PrefetchScalarGridSpec(
            num_scalar_prefetch=0,
            grid=(m_dst // TILE_DST, m_src // TILE_SRC),
            in_specs=[
                pl.BlockSpec((TILE_DST, TILE_SRC), lambda i, k: (i, k)),  # inc
                pl.BlockSpec((TILE_SRC, d_out), lambda i, k: (k, 0)),     # xw
                pl.BlockSpec((TILE_DST, 1), lambda i, k: (i, 0)),         # scale
                pl.BlockSpec((1, d_out), lambda i, k: (0, 0)),            # bias
            ],
            out_specs=pl.BlockSpec((TILE_DST, d_out), lambda i, k: (i, 0)),
            scratch_shapes=[pltpu.VMEM((TILE_DST, d_out), jnp.float32)],
        ),
        compiler_params=pltpu.CompilerParams(
            dimension_semantics=("parallel", "arbitrary"),
            vmem_limit_bytes=VMEM_LIMIT,
        ),
        cost_estimate=pl.CostEstimate(
            flops=flops, transcendentals=0, bytes_accessed=bytes_accessed),
    )(inc_bf16, xw_bf16, scale_f32, bias_f32)


# --------------------------- decoder forward ---------------------------------

def glorot(key, fan_in, fan_out):
    limit = (6.0 / (fan_in + fan_out)) ** 0.5
    return jax.random.uniform(key, (fan_in, fan_out), jnp.float32, -limit, limit)


def hyper_decoder_forward(params, x, hyperedge_index, num_nodes, num_edges):
    """Mirrors HyperDecoder.forward: loops MeanPoolingConv layers (row_norm)."""
    node_idx, edge_idx = hyperedge_index[0], hyperedge_index[1]
    alpha = float(params["prelu"])

    n_pad = _round_up(num_nodes, TILE_DST)
    e_pad = _round_up(num_edges, TILE_DST)

    # Dense padded incidence H[n, e] (duplicates accumulate, matching
    # scatter_add in the reference). Padded rows/cols are zero, so padded
    # nodes/edges never contribute.
    H = jnp.zeros((n_pad, e_pad), jnp.float32)
    H = H.at[node_idx, edge_idx].add(1.0)
    # H^T materialized once outside the kernels and reused by every layer
    # (same HBM bytes per call as an in-kernel transposed contraction, but a
    # plain MXU-friendly contraction inside the kernel).
    HT = H.T

    Dn = H.sum(axis=1)
    De = H.sum(axis=0)
    Dn_inv = jnp.where(Dn > 0, 1.0 / Dn, 0.0).reshape(-1, 1)   # [n_pad, 1]
    De_inv = jnp.where(De > 0, 1.0 / De, 0.0).reshape(-1, 1)   # [e_pad, 1]

    H_bf16 = H.astype(jnp.bfloat16)
    HT_bf16 = HT.astype(jnp.bfloat16)

    # Pad features to the lane width -> lane-dense, unmasked stores.
    d_in = x.shape[1]
    x_p = _pad2(x, n_pad, _round_up(d_in, LANE)).astype(jnp.bfloat16)

    e_f32 = None
    x_f32 = None
    edge_feat_dim = node_feat_dim = None
    for layer in params["layers"]:
        hid = layer["w_n2e"].shape[1]
        out = layer["w_e2n"].shape[1]
        hid_p = _round_up(hid, LANE)
        out_p = _round_up(out, LANE)

        w_n2e = _pad2(layer["w_n2e"], x_p.shape[1], hid_p).astype(jnp.bfloat16)
        b_n2e = _pad2(layer["b_n2e"][None, :], 1, hid_p)
        w_e2n = _pad2(layer["w_e2n"], hid_p, out_p).astype(jnp.bfloat16)
        b_e2n = _pad2(layer["b_e2n"][None, :], 1, out_p)

        # node -> edge (conv's own PReLU fused into the epilogue)
        xw = project(x_p, w_n2e)                               # [n_pad, hid_p] bf16
        e_f32 = aggregate(HT_bf16, xw, De_inv, b_n2e, alpha)   # [e_pad, hid_p] f32
        # dropout(p=0.0) is a no-op
        # edge -> node (HyperDecoder's PReLU fused into the epilogue)
        ew = project(e_f32.astype(jnp.bfloat16), w_e2n)        # [e_pad, out_p] bf16
        x_f32 = aggregate(H_bf16, ew, Dn_inv, b_e2n, alpha)    # [n_pad, out_p] f32

        x_p = x_f32.astype(jnp.bfloat16)
        edge_feat_dim, node_feat_dim = hid, out

    n_out = x_f32[:num_nodes, :node_feat_dim]
    e_out = e_f32[:num_edges, :edge_feat_dim]
    return n_out, e_out


def _reference_forward(params, x, H, alpha):
    """Pure-JAX f32 reference of the same math (for a sanity check)."""
    Dn = H.sum(axis=1)
    De = H.sum(axis=0)
    Dn_inv = jnp.where(Dn > 0, 1.0 / Dn, 0.0)[:, None]
    De_inv = jnp.where(De > 0, 1.0 / De, 0.0)[:, None]
    prelu = lambda v: jnp.where(v >= 0, v, alpha * v)
    e = None
    for layer in params["layers"]:
        e = prelu(De_inv * (H.T @ (x @ layer["w_n2e"])) + layer["b_n2e"][None, :])
        x = prelu(Dn_inv * (H @ (e @ layer["w_e2n"])) + layer["b_e2n"][None, :])
    return x, e


if __name__ == "__main__":
    # TODO(synk): HyperDecoder's LSTM `Smoother`, `input_mask` and
    # `embedding_mask` parameters are never used in forward(), so they are not
    # instantiated here.
    key = jax.random.PRNGKey(0)
    num_nodes, num_edges = 16, 8
    in_dim, edge_dim, node_dim = 32, 16, 24
    nnz = 40

    k_x, k_n, k_e, k_w0, k_w1, k_w2, k_w3 = jax.random.split(key, 7)
    x = jax.random.normal(k_x, (num_nodes, in_dim), jnp.float32)
    node_idx = jax.random.randint(k_n, (nnz,), 0, num_nodes)
    edge_idx = jax.random.randint(k_e, (nnz,), 0, num_edges)
    hyperedge_index = jnp.stack([node_idx, edge_idx])        # [2, nnz]

    # num_layers = 2:
    #   conv0: MeanPoolingConv(in_dim, in_dim, in_dim)
    #   conv1: MeanPoolingConv(in_dim, edge_dim, node_dim)
    # biases are zero-initialized in reset_parameters(); PReLU slope = 0.25.
    params = {
        "prelu": 0.25,
        "layers": [
            {
                "w_n2e": glorot(k_w0, in_dim, in_dim),
                "b_n2e": jnp.zeros((in_dim,), jnp.float32),
                "w_e2n": glorot(k_w1, in_dim, in_dim),
                "b_e2n": jnp.zeros((in_dim,), jnp.float32),
            },
            {
                "w_n2e": glorot(k_w2, in_dim, edge_dim),
                "b_n2e": jnp.zeros((edge_dim,), jnp.float32),
                "w_e2n": glorot(k_w3, edge_dim, node_dim),
                "b_e2n": jnp.zeros((node_dim,), jnp.float32),
            },
        ],
    }

    n_out, e_out = hyper_decoder_forward(params, x, hyperedge_index,
                                         num_nodes, num_edges)
    jax.block_until_ready((n_out, e_out))
    assert n_out.shape == (num_nodes, node_dim), n_out.shape
    assert e_out.shape == (num_edges, edge_dim), e_out.shape
    assert jnp.all(jnp.isfinite(n_out)) and jnp.all(jnp.isfinite(e_out))

    # Sanity check against an f32 pure-JAX reference (kernels run in bf16 with
    # f32 accumulation, so tolerances are loose).
    H_ref = jnp.zeros((num_nodes, num_edges), jnp.float32)
    H_ref = H_ref.at[node_idx, edge_idx].add(1.0)
    n_ref, e_ref = _reference_forward(params, x, H_ref, params["prelu"])
    assert jnp.allclose(n_out, n_ref, rtol=0.15, atol=0.15), \
        float(jnp.max(jnp.abs(n_out - n_ref)))
    assert jnp.allclose(e_out, e_ref, rtol=0.15, atol=0.15), \
        float(jnp.max(jnp.abs(e_out - e_ref)))

    print("KERNEL_OK")
</pallas_src>

<mosaic_0001>
module attributes {stable_mosaic.version = 11 : i64} {
  func.func @_project_kernel(%arg0: i32, %arg1: memref<128x128xbf16, #tpu.memory_space<vmem>>, %arg2: memref<128x128xbf16, #tpu.memory_space<vmem>>, %arg3: memref<128x128xbf16, #tpu.memory_space<vmem>>) attributes {dimension_semantics = [#tpu.dimension_semantics<parallel>], iteration_bounds = array<i64: 1>, scalar_prefetch = 0 : i64, scratch_operands = 0 : i64, tpu.core_type = #tpu.core_type<tc>, window_params = [{transform_indices = @transform_0, window_bounds = array<i64: 128, 128>}, {pipeline_mode = #tpu.pipeline_mode<synchronous>, transform_indices = @transform_1, window_bounds = array<i64: 128, 128>}, {transform_indices = @transform_2, window_bounds = array<i64: 128, 128>}]} {
    %c0 = arith.constant 0 : index
    %c0_0 = arith.constant 0 : index
    %0 = vector.load %arg1[%c0, %c0_0] : memref<128x128xbf16, #tpu.memory_space<vmem>>, vector<128x128xbf16>
    %c0_1 = arith.constant 0 : index
    %c0_2 = arith.constant 0 : index
    %1 = vector.load %arg2[%c0_1, %c0_2] : memref<128x128xbf16, #tpu.memory_space<vmem>>, vector<128x128xbf16>
    %cst = arith.constant dense<0.000000e+00> : vector<128x128xf32>
    %2 = tpu.matmul %0, %1, %cst {dimension_numbers = #tpu.dot_dimension_numbers<[1], [0], [0], [1], [0, 0, 1, 1], [], []>} : vector<128x128xbf16>, vector<128x128xbf16>, vector<128x128xf32> -> vector<128x128xf32>
    %3 = arith.truncf %2 : vector<128x128xf32> to vector<128x128xbf16>
    %c0_3 = arith.constant 0 : index
    %c0_4 = arith.constant 0 : index
    %4 = vector.load %arg3[%c0_3, %c0_4] : memref<128x128xbf16, #tpu.memory_space<vmem>>, vector<128x128xbf16>
    tpu.vector_store %arg3[%c0_3, %c0_4], %3 {strides = array<i32>} : memref<128x128xbf16, #tpu.memory_space<vmem>>, vector<128x128xbf16>,
    return
  }
  func.func @transform_0(%arg0: i32) -> (i32, i32) {
    %c0_i32 = arith.constant 0 : i32
    %c0_i32_0 = arith.constant 0 : i32
    return %arg0, %c0_i32 : i32, i32
  }
  func.func @transform_1(%arg0: i32) -> (i32, i32) {
    %c0_i32 = arith.constant 0 : i32
    %c0_i32_0 = arith.constant 0 : i32
    %c0_i32_1 = arith.constant 0 : i32
    return %c0_i32, %c0_i32_0 : i32, i32
  }
  func.func @transform_2(%arg0: i32) -> (i32, i32) {
    %c0_i32 = arith.constant 0 : i32
    %c0_i32_0 = arith.constant 0 : i32
    return %arg0, %c0_i32 : i32, i32
  }
}

</mosaic_0001>

<llo_original>
// kernel: tpu_custom_call.1
$region0: #{tpu_custom_call.1}
  #allocation0 [shape = 'u32[]', space=smem, size = 0x4, offset = 0x4, fixed_abs, tag = 'smem constant byte address 0x4 - core index']
  #allocation1 [shape = 'u32[144,128]{1,0:T(1,128)}', space=vmem, size = 0x12000, scoped, tag = 'internal scratch']
  %s0 = inlined_call_operand.hbm [shape: bf16[128,128], index: 0, kind: input, shape index: {}]
  %s1 = inlined_call_operand.hbm [shape: bf16[128,128], index: 1, kind: input, shape index: {}]
  %s2 = inlined_call_operand.hbm [shape: bf16[128,128], index: 2, kind: output, shape index: {}]
  %s3 = sld [smem:[#allocation0]]
  $region26: #{tpu_custom_call.1} parent=0
    _
  %s5 = ssub.s32 1, %s3
  %s6 = scalar_select 0, %s5, %s3
  $region1: #{tpu_custom_call.1} parent=0
    #allocation2 [shape = 'u8[32768]{0}', space=vmem, size = 0x8000, scoped, tag = 'input window, operand 0, single buffered']
    #allocation3 [shape = 's32[1]{0}', space=sflag, size = 0x4, scoped, tag = 'scoped memory for tpu_custom_call.1']
    #allocation4 [shape = 's32[1]{0}', space=sflag, size = 0x4, scoped, tag = 'scoped memory for tpu_custom_call.1']
    #allocation5 [shape = 'u8[32768]{0}', space=vmem, size = 0x8000, scoped, tag = 'input window, operand 1, single buffered']
    #allocation6 [shape = 's32[1]{0}', space=sflag, size = 0x4, scoped, tag = 'scoped memory for tpu_custom_call.1']
    #allocation7 [shape = 'u8[32768]{0}', space=vmem, size = 0x8000, scoped, tag = 'output window, operand 0, single buffered']
    %7 = vsyncpa [#allocation3], 0
    %8 = vsyncpa [#allocation6], 0
    %9 = vsyncpa [#allocation4], 0
    // Predicated region
    $region2: #{tpu_custom_call.1} parent=1 // pred_check
      _
    $region3: #{tpu_custom_call.1} parent=1 // pred_check_branch
      %11 = sbr.rel (0) target = $region5
    $region4: #{tpu_custom_call.1} parent=1 // pred_region
      %s13 = ssub.s32 1024, 1024
      %14 = vsyncadd [#allocation3], %s13
      %s15 = sshll.u32 [#allocation2], 4
      %s16 = int_to_ptr.vmem [resolvable:$true] %s15
      %21 = dma.hbm_to_vmem [thread:$0]  %s0, 1024, %s16, [#allocation3], 64, 64, 4
    $region5: #{tpu_custom_call.1} parent=1 // pred_fallthru
      _
    // Predicated region
    $region6: #{tpu_custom_call.1} parent=1 // pred_check
      _
    $region7: #{tpu_custom_call.1} parent=1 // pred_check_branch
      %23 = sbr.rel (0) target = $region9
    $region8: #{tpu_custom_call.1} parent=1 // pred_region
      %s25 = ssub.s32 1024, 1024
      %26 = vsyncadd [#allocation6], %s25
      %s27 = sshll.u32 [#allocation5], 4
      %s28 = int_to_ptr.vmem [resolvable:$true] %s27
      %33 = dma.hbm_to_vmem [thread:$0]  %s1, 1024, %s28, [#allocation6], 64, 64, 4
    $region9: #{tpu_custom_call.1} parent=1 // pred_fallthru
      _
    // Predicated region
    $region10: #{tpu_custom_call.1} parent=1 // pred_check
      _
    $region11: #{tpu_custom_call.1} parent=1 // pred_check_branch
      %35 = sbr.rel (0) target = $region13
    $region12: #{tpu_custom_call.1} parent=1 // pred_region
      %36 = dma.done [#allocation3], 1024
    $region13: #{tpu_custom_call.1} parent=1 // pred_fallthru
      _
    // Predicated region
    $region14: #{tpu_custom_call.1} parent=1 // pred_check
      _
    $region15: #{tpu_custom_call.1} parent=1 // pred_check_branch
      %38 = sbr.rel (0) target = $region17
    $region16: #{tpu_custom_call.1} parent=1 // pred_region
      %39 = dma.done [#allocation6], 1024
    $region17: #{tpu_custom_call.1} parent=1 // pred_fallthru
      _
    %v41 = vld [vmem:[#allocation2] sm:$0xf]
    %v42 = vld [vmem:[#allocation2 + $0x4] sm:$0xf]
    %v43 = vld [vmem:[#allocation2 + $0x8] sm:$0xf]
    %v44 = vld [vmem:[#allocation2 + $0xc] sm:$0xf]
    %v45 = vld [vmem:[#allocation2 + $0x10] sm:$0xf]
    %v46 = vld [vmem:[#allocation2 + $0x14] sm:$0xf]
    %v47 = vld [vmem:[#allocation2 + $0x18] sm:$0xf]
    %v48 = vld [vmem:[#allocation2 + $0x1c] sm:$0xf]
    %v49 = vld [vmem:[#allocation2 + $0x20] sm:$0xf]
    %v50 = vld [vmem:[#allocation2 + $0x24] sm:$0xf]
    %v51 = vld [vmem:[#allocation2 + $0x28] sm:$0xf]
    %v52 = vld [vmem:[#allocation2 + $0x2c] sm:$0xf]
    %v53 = vld [vmem:[#allocation2 + $0x30] sm:$0xf]
    %v54 = vld [vmem:[#allocation2 + $0x34] sm:$0xf]
    %v55 = vld [vmem:[#allocation2 + $0x38] sm:$0xf]
    %v56 = vld [vmem:[#allocation2 + $0x3c] sm:$0xf]
    %v57 = vld [vmem:[#allocation5] sm:$0xf]
    %v58 = vld [vmem:[#allocation5 + $0x4] sm:$0xf]
    %v59 = vld [vmem:[#allocation5 + $0x8] sm:$0xf]
    %v60 = vld [vmem:[#allocation5 + $0xc] sm:$0xf]
    %v61 = vld [vmem:[#allocation5 + $0x10] sm:$0xf]
    %v62 = vld [vmem:[#allocation5 + $0x14] sm:$0xf]
    %v63 = vld [vmem:[#allocation5 + $0x18] sm:$0xf]
    %v64 = vld [vmem:[#allocation5 + $0x1c] sm:$0xf]
    %v65 = vld [vmem:[#allocation5 + $0x20] sm:$0xf]
    %v66 = vld [vmem:[#allocation5 + $0x24] sm:$0xf]
    %v67 = vld [vmem:[#allocation5 + $0x28] sm:$0xf]
    %v68 = vld [vmem:[#allocation5 + $0x2c] sm:$0xf]
    %v69 = vld [vmem:[#allocation5 + $0x30] sm:$0xf]
    %v70 = vld [vmem:[#allocation5 + $0x34] sm:$0xf]
    %v71 = vld [vmem:[#allocation5 + $0x38] sm:$0xf]
    %v72 = vld [vmem:[#allocation5 + $0x3c] sm:$0xf]
    %v89 = vunpack.c.l.b16 %v41
    %v90 = vunpack.c.l.b16 %v42
    %v91 = vunpack.c.l.b16 %v43
    %v92 = vunpack.c.l.b16 %v44
    %v93 = vunpack.c.l.b16 %v45
    %v94 = vunpack.c.l.b16 %v46
    %v95 = vunpack.c.l.b16 %v47
    %v96 = vunpack.c.l.b16 %v48
    %v97 = vunpack.c.l.b16 %v49
    %v98 = vunpack.c.l.b16 %v50
    %v99 = vunpack.c.l.b16 %v51
    %v100 = vunpack.c.l.b16 %v52
    %v101 = vunpack.c.l.b16 %v53
    %v102 = vunpack.c.l.b16 %v54
    %v103 = vunpack.c.l.b16 %v55
    %v104 = vunpack.c.l.b16 %v56
    %v105 = vpack.c.b16 %v90, %v89
    %v106 = vpack.c.b16 %v92, %v91
    %v107 = vpack.c.b16 %v94, %v93
    %v108 = vpack.c.b16 %v96, %v95
    %v109 = vpack.c.b16 %v98, %v97
    %v110 = vpack.c.b16 %v100, %v99
    %v111 = vpack.c.b16 %v102, %v101
    %v112 = vpack.c.b16 %v104, %v103
    %v137 = vunpack.c.l.b16 %v57
    %v138 = vunpack.c.l.b16 %v58
    %v139 = vunpack.c.l.b16 %v59
    %v140 = vunpack.c.l.b16 %v60
    %v141 = vunpack.c.l.b16 %v61
    %v142 = vunpack.c.l.b16 %v62
    %v143 = vunpack.c.l.b16 %v63
    %v144 = vunpack.c.l.b16 %v64
    %v145 = vunpack.c.l.b16 %v65
    %v146 = vunpack.c.l.b16 %v66
    %v147 = vunpack.c.l.b16 %v67
    %v148 = vunpack.c.l.b16 %v68
    %v149 = vunpack.c.l.b16 %v69
    %v150 = vunpack.c.l.b16 %v70
    %v151 = vunpack.c.l.b16 %v71
    %v152 = vunpack.c.l.b16 %v72
    %v153 = vpack.c.b16 %v138, %v137
    %v154 = vpack.c.b16 %v140, %v139
    %v155 = vpack.c.b16 %v142, %v141
    %v156 = vpack.c.b16 %v144, %v143
    %v157 = vpack.c.b16 %v146, %v145
    %v158 = vpack.c.b16 %v148, %v147
    %v159 = vpack.c.b16 %v150, %v149
    %v160 = vpack.c.b16 %v152, %v151
    %169 = vmatprep.subr.bf16.mxu0 0
    %170 = vmatpush1.bf16.msra.mxu0 %v153
    %171 = vmatprep.subr.bf16.mxu0 0
    %172 = vmatpush1.bf16.msra.mxu0 %v154
    %173 = vmatprep.subr.bf16.mxu0 0
    %174 = vmatpush1.bf16.msra.mxu0 %v155
    %175 = vmatprep.subr.bf16.mxu0 0
    %176 = vmatpush1.bf16.msra.mxu0 %v156
    %177 = vmatprep.subr.bf16.mxu0 0
    %178 = vmatpush1.bf16.msra.mxu0 %v157
    %179 = vmatprep.subr.bf16.mxu0 0
    %180 = vmatpush1.bf16.msra.mxu0 %v158
    %181 = vmatprep.subr.bf16.mxu0 0
    %182 = vmatpush1.bf16.msra.mxu0 %v159
    %183 = vmatprep.subr.bf16.mxu0 0
    %184 = vmatpush1.bf16.msra.mxu0 %v160
    %185 = vmatprep.subr.bf16.mxu0 0
    %186 = vmatpush1.bf16.msra.mxu0 0
    %187 = vmatprep.subr.bf16.mxu0 0
    %188 = vmatpush1.bf16.msra.mxu0 0
    %189 = vmatprep.subr.bf16.mxu0 0
    %190 = vmatpush1.bf16.msra.mxu0 0
    %191 = vmatprep.subr.bf16.mxu0 0
    %192 = vmatpush1.bf16.msra.mxu0 0
    %193 = vmatprep.subr.bf16.mxu0 0
    %194 = vmatpush1.bf16.msra.mxu0 0
    %195 = vmatprep.subr.bf16.mxu0 0
    %196 = vmatpush1.bf16.msra.mxu0 0
    %197 = vmatprep.subr.bf16.mxu0 0
    %198 = vmatpush1.bf16.msra.mxu0 0
    %199 = vmatprep.subr.bf16.mxu0 0
    %200 = vmatpush1.bf16.msra.mxu0 0
    %201 = vmatprep.mubr.bf16.mxu0 0
    %202 = vmatmul.mubr.bf16.gmra.mrb[0].mxu0 %v105
    %v203 = vpop.f32.mrb[0].mxu0
    %v204 = vadd.f32 0.0, %v203
    %v205 = vpop.f32.mrb[0].mxu0
    %v206 = vpop.f32.mrb[0].mxu0
    %v207 = vadd.f32 0.0, %v206
    %v208 = vpop.f32.mrb[0].mxu0
    %209 = vmatprep.mubr.bf16.mxu0 0
    %210 = vmatmul.mubr.bf16.gmra.mrb[0].mxu0 %v106
    %v211 = vpop.f32.mrb[0].mxu0
    %v212 = vadd.f32 0.0, %v211
    %v213 = vpop.f32.mrb[0].mxu0
    %v214 = vpop.f32.mrb[0].mxu0
    %v215 = vadd.f32 0.0, %v214
    %v216 = vpop.f32.mrb[0].mxu0
    %217 = vmatprep.mubr.bf16.mxu0 0
    %218 = vmatmul.mubr.bf16.gmra.mrb[0].mxu0 %v107
    %v219 = vpop.f32.mrb[0].mxu0
    %v220 = vadd.f32 0.0, %v219
    %v221 = vpop.f32.mrb[0].mxu0
    %v222 = vpop.f32.mrb[0].mxu0
    %v223 = vadd.f32 0.0, %v222
    %v224 = vpop.f32.mrb[0].mxu0
    %225 = vmatprep.mubr.bf16.mxu0 0
    %226 = vmatmul.mubr.bf16.gmra.mrb[0].mxu0 %v108
    %v227 = vpop.f32.mrb[0].mxu0
    %v228 = vadd.f32 0.0, %v227
    %v229 = vpop.f32.mrb[0].mxu0
    %v230 = vpop.f32.mrb[0].mxu0
    %v231 = vadd.f32 0.0, %v230
    %v232 = vpop.f32.mrb[0].mxu0
    %233 = vmatprep.mubr.bf16.mxu0 0
    %234 = vmatmul.mubr.bf16.gmra.mrb[0].mxu0 %v109
    %v235 = vpop.f32.mrb[0].mxu0
    %v236 = vadd.f32 0.0, %v235
    %v237 = vpop.f32.mrb[0].mxu0
    %v238 = vpop.f32.mrb[0].mxu0
    %v239 = vadd.f32 0.0, %v238
    %v240 = vpop.f32.mrb[0].mxu0
    %241 = vmatprep.mubr.bf16.mxu0 0
    %242 = vmatmul.mubr.bf16.gmra.mrb[0].mxu0 %v110
    %v243 = vpop.f32.mrb[0].mxu0
    %v244 = vadd.f32 0.0, %v243
    %v245 = vpop.f32.mrb[0].mxu0
    %v246 = vpop.f32.mrb[0].mxu0
    %v247 = vadd.f32 0.0, %v246
    %v248 = vpop.f32.mrb[0].mxu0
    %249 = vmatprep.mubr.bf16.mxu0 0
    %250 = vmatmul.mubr.bf16.gmra.mrb[0].mxu0 %v111
    %v251 = vpop.f32.mrb[0].mxu0
    %v252 = vadd.f32 0.0, %v251
    %v253 = vpop.f32.mrb[0].mxu0
    %v254 = vpop.f32.mrb[0].mxu0
    %v255 = vadd.f32 0.0, %v254
    %v256 = vpop.f32.mrb[0].mxu0
    %257 = vmatprep.mubr.bf16.mxu0 0
    %258 = vmatmul.mubr.bf16.gmra.mrb[0].mxu0 %v112
    %v259 = vpop.f32.mrb[0].mxu0
    %v260 = vadd.f32 0.0, %v259
    %v261 = vpop.f32.mrb[0].mxu0
    %v262 = vpop.f32.mrb[0].mxu0
    %v263 = vadd.f32 0.0, %v262
    %v264 = vpop.f32.mrb[0].mxu0
    %265 = vdwg.mxu0
    %v266 = vpack.c.bf16 %v207, %v204
    %v267 = vpack.c.bf16 %v215, %v212
    %v268 = vpack.c.bf16 %v223, %v220
    %v269 = vpack.c.bf16 %v231, %v228
    %v270 = vpack.c.bf16 %v239, %v236
    %v271 = vpack.c.bf16 %v247, %v244
    %v272 = vpack.c.bf16 %v255, %v252
    %v273 = vpack.c.bf16 %v263, %v260
    %v282 = vunpack.c.l.b16 %v266
    %v283 = vunpack.c.h.b16 %v266
    %v284 = vunpack.c.l.b16 %v267
    %v285 = vunpack.c.h.b16 %v267
    %v286 = vunpack.c.l.b16 %v268
    %v287 = vunpack.c.h.b16 %v268
    %v288 = vunpack.c.l.b16 %v269
    %v289 = vunpack.c.h.b16 %v269
    %v290 = vunpack.c.l.b16 %v270
    %v291 = vunpack.c.h.b16 %v270
    %v292 = vunpack.c.l.b16 %v271
    %v293 = vunpack.c.h.b16 %v271
    %v294 = vunpack.c.l.b16 %v272
    %v295 = vunpack.c.h.b16 %v272
    %v296 = vunpack.c.l.b16 %v273
    %v297 = vunpack.c.h.b16 %v273
    %v298 = vpack.c.b16 %v282, %v282
    %v299 = vpack.c.b16 %v283, %v283
    %v300 = vpack.c.b16 %v284, %v284
    %v301 = vpack.c.b16 %v285, %v285
    %v302 = vpack.c.b16 %v286, %v286
    %v303 = vpack.c.b16 %v287, %v287
    %v304 = vpack.c.b16 %v288, %v288
    %v305 = vpack.c.b16 %v289, %v289
    %v306 = vpack.c.b16 %v290, %v290
    %v307 = vpack.c.b16 %v291, %v291
    %v308 = vpack.c.b16 %v292, %v292
    %v309 = vpack.c.b16 %v293, %v293
    %v310 = vpack.c.b16 %v294, %v294
    %v311 = vpack.c.b16 %v295, %v295
    %v312 = vpack.c.b16 %v296, %v296
    %v313 = vpack.c.b16 %v297, %v297
    %330 = vst [vmem:[#allocation7] sm:$0xf] %v298
    %331 = vst [vmem:[#allocation7 + $0x4] sm:$0xf] %v299
    %332 = vst [vmem:[#allocation7 + $0x8] sm:$0xf] %v300
    %333 = vst [vmem:[#allocation7 + $0xc] sm:$0xf] %v301
    %334 = vst [vmem:[#allocation7 + $0x10] sm:$0xf] %v302
    %335 = vst [vmem:[#allocation7 + $0x14] sm:$0xf] %v303
    %336 = vst [vmem:[#allocation7 + $0x18] sm:$0xf] %v304
    %337 = vst [vmem:[#allocation7 + $0x1c] sm:$0xf] %v305
    %338 = vst [vmem:[#allocation7 + $0x20] sm:$0xf] %v306
    %339 = vst [vmem:[#allocation7 + $0x24] sm:$0xf] %v307
    %340 = vst [vmem:[#allocation7 + $0x28] sm:$0xf] %v308
    %341 = vst [vmem:[#allocation7 + $0x2c] sm:$0xf] %v309
    %342 = vst [vmem:[#allocation7 + $0x30] sm:$0xf] %v310
    %343 = vst [vmem:[#allocation7 + $0x34] sm:$0xf] %v311
    %344 = vst [vmem:[#allocation7 + $0x38] sm:$0xf] %v312
    %345 = vst [vmem:[#allocation7 + $0x3c] sm:$0xf] %v313
    // Predicated region
    $region18: #{tpu_custom_call.1} parent=1 // pred_check
      _
    $region19: #{tpu_custom_call.1} parent=1 // pred_check_branch
      %347 = sbr.rel (0) target = $region21
    $region20: #{tpu_custom_call.1} parent=1 // pred_region
      %s349 = ssub.s32 1024, 1024
      %350 = vsyncadd [#allocation4], %s349
      %s351 = sshll.u32 [#allocation7], 4
      %s352 = int_to_ptr.vmem [resolvable:$true] %s351
      %357 = dma.vmem_to_hbm [thread:$0]  %s352, 1024, %s2, [#allocation4], 64, 64, 4
    $region21: #{tpu_custom_call.1} parent=1 // pred_fallthru
      _
    // Predicated region
    $region22: #{tpu_custom_call.1} parent=1 // pred_check
      _
    $region23: #{tpu_custom_call.1} parent=1 // pred_check_branch
      %359 = sbr.rel (0) target = $region25
    $region24: #{tpu_custom_call.1} parent=1 // pred_region
      %360 = dma.done [#allocation4], 1024
    $region25: #{tpu_custom_call.1} parent=1 // pred_fallthru
      _
    %361 = vsyncpa [#allocation3], 1
    %362 = vsyncpa [#allocation6], 1
    %363 = vsyncpa [#allocation4], 1

</llo_original>
